<compile_context>
chip_gen: v5e
topology: v5e:2x2
jax: 0.10.0
libtpu: 0.0.40
codegen_flags: <defaults>
</compile_context>

<pallas_src>
import functools

import jax
import jax.numpy as jnp
from jax import lax
from jax.experimental import pallas as pl
from jax.experimental.pallas import tpu as pltpu


def firstconv3x3_forward(x_nchw, weight, gamma, beta, running_mean, running_var,
                         stride=2, eps=1e-5, out_dtype=jnp.float32):
    """x_nchw: (N, Cin, H, W) f32.  weight: (Cout, Cin, 3, 3) PyTorch OIHW layout."""
    N, Cin, H, W = x_nchw.shape
    Cout = weight.shape[0]
    K, P = 3, 1
    s = int(stride)
    OH = (H + 2 * P - K) // s + 1
    OW = (W + 2 * P - K) // s + 1
    A = (K - 1) // s               # number of extra "row bands" (tap row offset // s)
    PH = OH + A                    # phase-plane height
    Hp = s * PH                    # padded height
    Wp = s * (OW + A)              # padded width
    L = OH * OW                    # flattened output spatial length (lane dimension)
    R = s * K * Cin                # rows of the phase-major input block
    KKC = K * K * Cin
    out_itemsize = jnp.dtype(out_dtype).itemsize

    # ---- fold BatchNorm (running stats) into weight scale + bias -----------------
    scale = gamma / jnp.sqrt(running_var + eps)                      # (Cout,)
    bias = (beta - running_mean * scale).astype(jnp.float32)         # (Cout,)
    w_eff = weight * scale[:, None, None, None]                      # (Cout,Cin,3,3) f32
    bias2d = bias.reshape(Cout, 1)

    # ---- per-group weight matrices --------------------------------------------
    # Group a covers taps kh = a*s + p (p = stride phase).  Columns are ordered
    # (p, kw, ci) to match the phase-major xg rows, so each group's dot reads a
    # CONTIGUOUS leading row slice of xg.
    n_groups = A + 1
    rows_per_group = []
    w_groups = []
    for a in range(n_groups):
        npha = min(s, K - a * s)                                     # phases in group a
        rows_per_group.append(npha * K * Cin)
        wg = w_eff[:, :, a * s:a * s + npha, :]                      # (Cout, Cin, p, kw)
        wg = jnp.transpose(wg, (0, 2, 3, 1)).reshape(Cout, npha * K * Cin)
        w_groups.append(wg.astype(jnp.bfloat16))

    # ---- wrapper glue: pad + phase-major rearrangement (no im2col in HBM) --------
    xb = x_nchw.astype(jnp.bfloat16)
    xp = jnp.pad(xb, ((0, 0), (0, 0), (P, Hp - H - P), (P, Wp - W - P)))
    cols = []
    for kw in range(K):            # column tap kw -> padded columns kw, kw+s, ...
        c = lax.slice(xp, (0, 0, 0, kw),
                      (N, Cin, Hp, kw + s * (OW - 1) + 1),
                      (1, 1, 1, s))                                  # (N, Cin, Hp, OW)
        cols.append(c.reshape(N, Cin, PH, s, OW))
    xs = jnp.stack(cols, axis=1)                                     # (N,K,Cin,PH,s,OW)
    # -> (n, p, kw, ci, r, c): row index = (p*K + kw)*Cin + ci, lane = r*OW + c
    xg = jnp.transpose(xs, (0, 4, 1, 2, 3, 5)).reshape(N, R, PH * OW)

    # ---- Cout tiling: keeps both v7x TCs busy at N==1, caps f32 output block -----
    TCO = Cout
    if Cout % 16 == 0:
        TCO = Cout // 2
        while TCO % 16 == 0 and TCO * L * 4 > (4 << 20):
            TCO //= 2
    n_co = Cout // TCO

    # ---- the Pallas kernel: <= n_groups accumulating MXU dots, zero copies -------
    def kernel(*refs):
        xg_ref = refs[0]
        w_refs = refs[1:1 + n_groups]
        b_ref = refs[1 + n_groups]
        out_ref = refs[2 + n_groups]
        acc = jnp.dot(w_refs[0][...],
                      xg_ref[0, :rows_per_group[0], 0:L],
                      preferred_element_type=jnp.float32)            # (TCO, L) f32
        for a in range(1, n_groups):
            acc = acc + jnp.dot(w_refs[a][...],
                                xg_ref[0, :rows_per_group[a], a * OW:a * OW + L],
                                preferred_element_type=jnp.float32)
        out_ref[0] = (acc + b_ref[...]).astype(out_ref.dtype)

    in_specs = [pl.BlockSpec((1, R, PH * OW), lambda n, co: (n, 0, 0))]
    for a in range(n_groups):
        in_specs.append(pl.BlockSpec((TCO, rows_per_group[a]), lambda n, co: (co, 0)))
    in_specs.append(pl.BlockSpec((TCO, 1), lambda n, co: (co, 0)))
    out_spec = pl.BlockSpec((1, TCO, L), lambda n, co: (n, co, 0))

    # ---- VMEM budget (v7x 64 MiB aware) & cost hint -------------------------------
    xg_blk = R * PH * OW * 2                         # bf16 input block
    w_blk = sum(TCO * r * 2 for r in rows_per_group)  # bf16 weight blocks
    out_blk = TCO * L * out_itemsize                 # output block
    acc_b = TCO * L * 4                              # f32 matmul result staging
    need = 2 * (xg_blk + w_blk + TCO * 4 + out_blk) + acc_b
    vmem_limit = int(min(max(2 * need, 16 << 20), 30 << 20))

    cost = pl.CostEstimate(
        flops=2 * N * L * KKC * Cout,
        transcendentals=0,
        bytes_accessed=(N * R * PH * OW * 2 + Cout * KKC * 2
                        + N * Cout * L * out_itemsize))

    out_flat = pl.pallas_call(
        kernel,
        out_shape=jax.ShapeDtypeStruct((N, Cout, L), out_dtype),
        grid=(N, n_co),
        in_specs=in_specs,
        out_specs=out_spec,
        compiler_params=pltpu.CompilerParams(
            dimension_semantics=("parallel", "parallel"),
            vmem_limit_bytes=vmem_limit),
        cost_estimate=cost,
    )(xg, *w_groups, bias2d)

    # (N, Cout, OH*OW) -> (N, Cout, OH, OW): contiguous reshape, no transpose.
    return out_flat.reshape(N, Cout, OH, OW)


def _reference(x, weight, gamma, beta, running_mean, running_var, stride=2, eps=1e-5):
    # Reference with the same bf16-rounded operands the kernel feeds the MXU.
    scale = gamma / jnp.sqrt(running_var + eps)
    bias = beta - running_mean * scale
    w_eff = (weight * scale[:, None, None, None]).astype(jnp.bfloat16).astype(jnp.float32)
    xb = x.astype(jnp.bfloat16).astype(jnp.float32)
    y = lax.conv_general_dilated(
        xb, w_eff, window_strides=(stride, stride),
        padding=((1, 1), (1, 1)),
        dimension_numbers=("NCHW", "OIHW", "NCHW"),
        precision=lax.Precision.HIGHEST)
    return y + bias[None, :, None, None]


def _run_case(key, N, Cin, H, W, Cout, stride):
    ks = jax.random.split(key, 6)
    x = jax.random.normal(ks[0], (N, Cin, H, W), dtype=jnp.float32)
    weight = jax.random.normal(ks[1], (Cout, Cin, 3, 3), dtype=jnp.float32) * 0.1
    gamma = 1.0 + 0.1 * jax.random.normal(ks[2], (Cout,), dtype=jnp.float32)
    beta = 0.1 * jax.random.normal(ks[3], (Cout,), dtype=jnp.float32)
    running_mean = 0.1 * jax.random.normal(ks[4], (Cout,), dtype=jnp.float32)
    running_var = jax.random.uniform(ks[5], (Cout,), dtype=jnp.float32,
                                     minval=0.5, maxval=1.5)

    fwd = jax.jit(functools.partial(firstconv3x3_forward, stride=stride))
    out = jax.block_until_ready(fwd(x, weight, gamma, beta, running_mean, running_var))
    ref = _reference(x, weight, gamma, beta, running_mean, running_var, stride=stride)

    OH = (H + 2 - 3) // stride + 1
    OW = (W + 2 - 3) // stride + 1
    assert out.shape == (N, Cout, OH, OW), out.shape
    max_err = float(jnp.max(jnp.abs(out - ref)))
    assert jnp.allclose(out, ref, atol=2e-3, rtol=2e-3), \
        f"mismatch vs reference (stride={stride}): {max_err}"


if __name__ == "__main__":
    # small shapes consistent with firstconv3x3(inp=4, oup=8, stride)
    key = jax.random.PRNGKey(0)
    k1, k2 = jax.random.split(key)
    _run_case(k1, N=2, Cin=4, H=16, W=16, Cout=8, stride=2)  # stride-2 path: 2 MXU dots
    _run_case(k2, N=2, Cin=4, H=16, W=16, Cout=8, stride=1)  # stride-1 path: 3 MXU dots
    print("KERNEL_OK")
</pallas_src>

<mosaic_0001>
module attributes {stable_mosaic.version = 11 : i64} {
  func.func @kernel(%arg0: i32, %arg1: i32, %arg2: memref<1x24x72xbf16, #tpu.memory_space<vmem>>, %arg3: memref<8x24xbf16, #tpu.memory_space<vmem>>, %arg4: memref<8x12xbf16, #tpu.memory_space<vmem>>, %arg5: memref<8x1xf32, #tpu.memory_space<vmem>>, %arg6: memref<1x8x64xf32, #tpu.memory_space<vmem>>) attributes {dimension_semantics = [#tpu.dimension_semantics<parallel>, #tpu.dimension_semantics<parallel>], iteration_bounds = array<i64: 2, 1>, scalar_prefetch = 0 : i64, scratch_operands = 0 : i64, tpu.core_type = #tpu.core_type<tc>, window_params = [{transform_indices = @transform_0, window_bounds = array<i64: 1, 24, 72>}, {transform_indices = @transform_1, window_bounds = array<i64: 8, 24>}, {transform_indices = @transform_2, window_bounds = array<i64: 8, 12>}, {transform_indices = @transform_3, window_bounds = array<i64: 8, 1>}, {transform_indices = @transform_4, window_bounds = array<i64: 1, 8, 64>}]} {
    %c0 = arith.constant 0 : index
    %c0_0 = arith.constant 0 : index
    %0 = vector.load %arg3[%c0, %c0_0] : memref<8x24xbf16, #tpu.memory_space<vmem>>, vector<8x24xbf16>
    %c0_1 = arith.constant 0 : index
    %c0_2 = arith.constant 0 : index
    %c0_3 = arith.constant 0 : index
    %1 = vector.load %arg2[%c0_1, %c0_2, %c0_3] : memref<1x24x72xbf16, #tpu.memory_space<vmem>>, vector<1x24x64xbf16>
    %2 = vector.shape_cast %1 : vector<1x24x64xbf16> to vector<24x64xbf16>
    %cst = arith.constant dense<0.000000e+00> : vector<8x64xf32>
    %3 = tpu.matmul %0, %2, %cst {dimension_numbers = #tpu.dot_dimension_numbers<[1], [0], [0], [1], [0, 0, 1, 1], [], []>} : vector<8x24xbf16>, vector<24x64xbf16>, vector<8x64xf32> -> vector<8x64xf32>
    %c0_4 = arith.constant 0 : index
    %c0_5 = arith.constant 0 : index
    %4 = vector.load %arg4[%c0_4, %c0_5] : memref<8x12xbf16, #tpu.memory_space<vmem>>, vector<8x12xbf16>
    %c0_6 = arith.constant 0 : index
    %c0_7 = arith.constant 0 : index
    %c8 = arith.constant 8 : index
    %5 = vector.load %arg2[%c0_6, %c0_7, %c8] : memref<1x24x72xbf16, #tpu.memory_space<vmem>>, vector<1x12x64xbf16>
    %6 = vector.shape_cast %5 : vector<1x12x64xbf16> to vector<12x64xbf16>
    %cst_8 = arith.constant dense<0.000000e+00> : vector<8x64xf32>
    %7 = tpu.matmul %4, %6, %cst_8 {dimension_numbers = #tpu.dot_dimension_numbers<[1], [0], [0], [1], [0, 0, 1, 1], [], []>} : vector<8x12xbf16>, vector<12x64xbf16>, vector<8x64xf32> -> vector<8x64xf32>
    %8 = arith.addf %3, %7 : vector<8x64xf32>
    %c0_9 = arith.constant 0 : index
    %c0_10 = arith.constant 0 : index
    %9 = vector.load %arg5[%c0_9, %c0_10] : memref<8x1xf32, #tpu.memory_space<vmem>>, vector<8x1xf32>
    %10 = vector.broadcast %9 : vector<8x1xf32> to vector<8x64xf32>
    %11 = arith.addf %8, %10 : vector<8x64xf32>
    %c0_11 = arith.constant 0 : index
    %c0_12 = arith.constant 0 : index
    %c0_13 = arith.constant 0 : index
    %12 = vector.load %arg6[%c0_11, %c0_12, %c0_13] : memref<1x8x64xf32, #tpu.memory_space<vmem>>, vector<1x8x64xf32>
    %13 = vector.shape_cast %12 : vector<1x8x64xf32> to vector<8x64xf32>
    %14 = vector.shape_cast %11 : vector<8x64xf32> to vector<1x8x64xf32>
    tpu.vector_store %arg6[%c0_11, %c0_12, %c0_13], %14 {strides = array<i32>} : memref<1x8x64xf32, #tpu.memory_space<vmem>>, vector<1x8x64xf32>,
    return
  }
  func.func @transform_0(%arg0: i32, %arg1: i32) -> (i32, i32, i32) {
    %c0_i32 = arith.constant 0 : i32
    %c0_i32_0 = arith.constant 0 : i32
    %c0_i32_1 = arith.constant 0 : i32
    return %arg0, %c0_i32, %c0_i32_0 : i32, i32, i32
  }
  func.func @transform_1(%arg0: i32, %arg1: i32) -> (i32, i32) {
    %c0_i32 = arith.constant 0 : i32
    %c0_i32_0 = arith.constant 0 : i32
    return %arg1, %c0_i32 : i32, i32
  }
  func.func @transform_2(%arg0: i32, %arg1: i32) -> (i32, i32) {
    %c0_i32 = arith.constant 0 : i32
    %c0_i32_0 = arith.constant 0 : i32
    return %arg1, %c0_i32 : i32, i32
  }
  func.func @transform_3(%arg0: i32, %arg1: i32) -> (i32, i32) {
    %c0_i32 = arith.constant 0 : i32
    %c0_i32_0 = arith.constant 0 : i32
    return %arg1, %c0_i32 : i32, i32
  }
  func.func @transform_4(%arg0: i32, %arg1: i32) -> (i32, i32, i32) {
    %c0_i32 = arith.constant 0 : i32
    %c0_i32_0 = arith.constant 0 : i32
    return %arg0, %arg1, %c0_i32 : i32, i32, i32
  }
}

</mosaic_0001>

<llo_original>
// kernel: firstconv3x3_forward.1
$region0: #{firstconv3x3_forward.1}
  #allocation0 [shape = 'u32[]', space=smem, size = 0x4, offset = 0x4, fixed_abs, tag = 'smem constant byte address 0x4 - core index']
  #allocation1 [shape = 'u32[72,128]{1,0:T(1,128)}', space=vmem, size = 0x9000, scoped, tag = 'internal scratch']
  %s0 = inlined_call_operand.vmem [shape: bf16[2,24,72], index: 0, kind: input, shape index: {}]
  %s1 = inlined_call_operand.vmem [shape: bf16[8,24], index: 1, kind: input, shape index: {}]
  %s2 = inlined_call_operand.vmem [shape: bf16[8,12], index: 2, kind: input, shape index: {}]
  %s3 = inlined_call_operand.vmem [shape: f32[8,1], index: 3, kind: input, shape index: {}]
  %s4 = inlined_call_operand.vmem [shape: f32[2,8,64], index: 4, kind: output, shape index: {}]
  %s5 = sld [smem:[#allocation0]]
  $region49: #{firstconv3x3_forward.1} parent=0
    _
  %s7 = ssub.s32 1, %s5
  %s8 = scalar_select 0, %s7, %s5
  loop: start=0, step=1, limit=4
  $region2: #{firstconv3x3_forward.1} parent=0 // loop_pre_header
    _
  $region3: #{firstconv3x3_forward.1} parent=0 // loop_header
    %s10 = sphi 0, %s14
    %p11 = scmp.ge.s32.totalorder %s10, 4
    %s17 = sphi 0, %s29
    %s18 = sphi 0, %s25
    %s19 = sphi 0, %s17
    %s20 = sphi 0, %s18
    %s21 = sphi 0, %s19
    %s22 = sphi 0, %s20
    %s32 = sphi 0, %s34
    %s35 = sphi 0, %s32
    %s36 = sphi 0, %s35
    %s52 = sphi 0, %s36
    %s58 = sphi 0, %s60
    %s61 = sphi 0, %s58
    %s62 = sphi 0, %s61
    %s78 = sphi 0, %s62
    %s84 = sphi 0, %s86
    %s87 = sphi 0, %s84
    %s88 = sphi 0, %s87
    %s104 = sphi 0, %s88
    %s110 = sphi 0, %s112
    %s113 = sphi 0, %s110
    %s114 = sphi 0, %s113
    %s130 = sphi 0, %s114
    %s138 = sphi 0, %s140
    %s141 = sphi 0, %s138
    %s142 = sphi 0, %s141
    %s158 = sphi 0, %s142
  $region4: #{firstconv3x3_forward.1} parent=0 // loop_header_branch
    %13 = sbr.rel (%p11) target = $region8
  $region5: #{firstconv3x3_forward.1} parent=0 // loop_body
    %s15 = ssub.s32 %s10, 1
    %s16 = ssub.s32 %s10, 2
    %s23 = sadd.s32 1, %s18
    %p24 = scmp.ge.s32.totalorder %s23, 1
    %s25 = scalar_select %p24, 0, %s23
    %s26 = sadd.s32 1, %s17
    %s27 = scalar_select %p24, %s26, %s17
    %p28 = scmp.ge.s32.totalorder %s27, 2
    %s29 = scalar_select %p28, 0, %s27
    %s30 = ssub.s32 %s17, %s29
    %p31 = scmp.eq.s32.totalorder %s30, 0
    %s33 = sadd.s32 %s32, 1
    %s34 = scalar_select %p31, %s32, %s33
    %p37 = pneg %p31
    %p38 = scmp.eq.s32.totalorder %s10, 1
    %p39 = por %p37, %p38
    %p40 = scmp.ne.s32.totalorder %s32, %s35
    %p41 = scmp.eq.s32.totalorder %s10, 0
    %p42 = por %p40, %p41
    %p43 = scmp.ne.s32.totalorder %s32, %s35
    %p44 = scmp.eq.s32.totalorder %s15, 1
    %p45 = por %p43, %p44
    %p46 = scmp.ne.s32.totalorder %s35, %s36
    %p47 = scmp.eq.s32.totalorder %s15, 0
    %p48 = por %p46, %p47
    %p49 = scmp.ne.s32.totalorder %s35, %s36
    %p50 = scmp.eq.s32.totalorder %s16, 1
    %p51 = por %p49, %p50
    %p53 = scmp.ne.s32.totalorder %s36, %s52
    %p54 = scmp.eq.s32.totalorder %s16, 0
    %p55 = por %p53, %p54
    %s56 = ssub.s32 %s18, %s25
    %p57 = scmp.eq.s32.totalorder %s56, 0
    %s59 = sadd.s32 %s58, 1
    %s60 = scalar_select %p57, %s58, %s59
    %p63 = pneg %p57
    %p64 = scmp.eq.s32.totalorder %s10, 1
    %p65 = por %p63, %p64
    %p66 = scmp.ne.s32.totalorder %s58, %s61
    %p67 = scmp.eq.s32.totalorder %s10, 0
    %p68 = por %p66, %p67
    %p69 = scmp.ne.s32.totalorder %s58, %s61
    %p70 = scmp.eq.s32.totalorder %s15, 1
    %p71 = por %p69, %p70
    %p72 = scmp.ne.s32.totalorder %s61, %s62
    %p73 = scmp.eq.s32.totalorder %s15, 0
    %p74 = por %p72, %p73
    %p75 = scmp.ne.s32.totalorder %s61, %s62
    %p76 = scmp.eq.s32.totalorder %s16, 1
    %p77 = por %p75, %p76
    %p79 = scmp.ne.s32.totalorder %s62, %s78
    %p80 = scmp.eq.s32.totalorder %s16, 0
    %p81 = por %p79, %p80
    %s82 = ssub.s32 %s18, %s25
    %p83 = scmp.eq.s32.totalorder %s82, 0
    %s85 = sadd.s32 %s84, 1
    %s86 = scalar_select %p83, %s84, %s85
    %p89 = pneg %p83
    %p90 = scmp.eq.s32.totalorder %s10, 1
    %p91 = por %p89, %p90
    %p92 = scmp.ne.s32.totalorder %s84, %s87
    %p93 = scmp.eq.s32.totalorder %s10, 0
    %p94 = por %p92, %p93
    %p95 = scmp.ne.s32.totalorder %s84, %s87
    %p96 = scmp.eq.s32.totalorder %s15, 1
    %p97 = por %p95, %p96
    %p98 = scmp.ne.s32.totalorder %s87, %s88
    %p99 = scmp.eq.s32.totalorder %s15, 0
    %p100 = por %p98, %p99
    %p101 = scmp.ne.s32.totalorder %s87, %s88
    %p102 = scmp.eq.s32.totalorder %s16, 1
    %p103 = por %p101, %p102
    %p105 = scmp.ne.s32.totalorder %s88, %s104
    %p106 = scmp.eq.s32.totalorder %s16, 0
    %p107 = por %p105, %p106
    %s108 = ssub.s32 %s18, %s25
    %p109 = scmp.eq.s32.totalorder %s108, 0
    %s111 = sadd.s32 %s110, 1
    %s112 = scalar_select %p109, %s110, %s111
    %p115 = pneg %p109
    %p116 = scmp.eq.s32.totalorder %s10, 1
    %p117 = por %p115, %p116
    %p118 = scmp.ne.s32.totalorder %s110, %s113
    %p119 = scmp.eq.s32.totalorder %s10, 0
    %p120 = por %p118, %p119
    %p121 = scmp.ne.s32.totalorder %s110, %s113
    %p122 = scmp.eq.s32.totalorder %s15, 1
    %p123 = por %p121, %p122
    %p124 = scmp.ne.s32.totalorder %s113, %s114
    %p125 = scmp.eq.s32.totalorder %s15, 0
    %p126 = por %p124, %p125
    %p127 = scmp.ne.s32.totalorder %s113, %s114
    %p128 = scmp.eq.s32.totalorder %s16, 1
    %p129 = por %p127, %p128
    %p131 = scmp.ne.s32.totalorder %s114, %s130
    %p132 = scmp.eq.s32.totalorder %s16, 0
    %p133 = por %p131, %p132
    %s134 = ssub.s32 %s17, %s29
    %s135 = ssub.s32 %s18, %s25
    %s136 = sor.u32 %s134, %s135
    %p137 = scmp.eq.s32.totalorder %s136, 0
    %s139 = sadd.s32 %s138, 1
    %s140 = scalar_select %p137, %s138, %s139
    %p143 = pneg %p137
    %p144 = scmp.eq.s32.totalorder %s10, 1
    %p145 = por %p143, %p144
    %p146 = scmp.ne.s32.totalorder %s138, %s141
    %p147 = scmp.eq.s32.totalorder %s10, 0
    %p148 = por %p146, %p147
    %p149 = scmp.ne.s32.totalorder %s138, %s141
    %p150 = scmp.eq.s32.totalorder %s15, 1
    %p151 = por %p149, %p150
    %p152 = scmp.ne.s32.totalorder %s141, %s142
    %p153 = scmp.eq.s32.totalorder %s15, 0
    %p154 = por %p152, %p153
    %p155 = scmp.ne.s32.totalorder %s141, %s142
    %p156 = scmp.eq.s32.totalorder %s16, 1
    %p157 = por %p155, %p156
    %p159 = scmp.ne.s32.totalorder %s142, %s158
    %p160 = scmp.eq.s32.totalorder %s16, 0
    %p161 = por %p159, %p160
    %p162 = scmp.le.s32.totalorder 1, %s10
    %p163 = scmp.lt.s32.totalorder %s10, 3
    %p164 = pnand %p162, %p163
    %p165 = pneg %p164
    // Predicated region
    $region9: #{firstconv3x3_forward.1} parent=5 // pred_check
      _
    $region10: #{firstconv3x3_forward.1} parent=5 // pred_check_branch
      %167 = sbr.rel (%p164) target = $region12
    $region11: #{firstconv3x3_forward.1} parent=5 // pred_region
      %s168 = ssub.s32 %s10, 1
      // Predicated region
      $region13: #{firstconv3x3_forward.1} parent=11 // pred_check
        %p169 = pneg %p74
      $region14: #{firstconv3x3_forward.1} parent=11 // pred_check_branch
        %171 = sbr.rel (%p169) target = $region16
      $region15: #{firstconv3x3_forward.1} parent=11 // pred_region
        %p172 = scmp.lt.s32.totalorder %s20, 0
        %s173 = scalar_select %p172, %s20, 0
        %s174 = smul.addr %s173, 4
        %s175 = scalar_lea.vmem %s1, %s174
      $region16: #{firstconv3x3_forward.1} parent=11 // pred_fallthru
        _
      // Predicated region
      $region17: #{firstconv3x3_forward.1} parent=11 // pred_check
        %p176 = pneg %p100
      $region18: #{firstconv3x3_forward.1} parent=11 // pred_check_branch
        %178 = sbr.rel (%p176) target = $region20
      $region19: #{firstconv3x3_forward.1} parent=11 // pred_region
        %p179 = scmp.lt.s32.totalorder %s20, 0
        %s180 = scalar_select %p179, %s20, 0
        %s181 = smul.addr %s180, 4
        %s182 = scalar_lea.vmem %s2, %s181
      $region20: #{firstconv3x3_forward.1} parent=11 // pred_fallthru
        _
      // Predicated region
      $region21: #{firstconv3x3_forward.1} parent=11 // pred_check
        %p183 = pneg %p126
      $region22: #{firstconv3x3_forward.1} parent=11 // pred_check_branch
        %185 = sbr.rel (%p183) target = $region24
      $region23: #{firstconv3x3_forward.1} parent=11 // pred_region
        %p186 = scmp.lt.s32.totalorder %s20, 0
        %s187 = scalar_select %p186, %s20, 0
        %s188 = smul.addr %s187, 8
        %s189 = scalar_lea.vmem %s3, %s188
      $region24: #{firstconv3x3_forward.1} parent=11 // pred_fallthru
        _
    $region12: #{firstconv3x3_forward.1} parent=5 // pred_fallthru
      _
    %p190 = scmp.lt.s32.totalorder %s10, 2
    // Predicated region
    $region25: #{firstconv3x3_forward.1} parent=5 // pred_check
      %p191 = pneg %p190
    $region26: #{firstconv3x3_forward.1} parent=5 // pred_check_branch
      %193 = sbr.rel (%p191) target = $region28
    $region27: #{firstconv3x3_forward.1} parent=5 // pred_region
      // Predicated region
      $region29: #{firstconv3x3_forward.1} parent=27 // pred_check
        %p194 = pneg %p42
      $region30: #{firstconv3x3_forward.1} parent=27 // pred_check_branch
        %196 = sbr.rel (%p194) target = $region32
      $region31: #{firstconv3x3_forward.1} parent=27 // pred_region
        %p197 = scmp.lt.s32.totalorder %s17, 1
        %s198 = scalar_select %p197, %s17, 1
        %s199 = smul.addr %s198, 3
        %s200 = smul.addr %s199, 4
        %s201 = scalar_lea.vmem %s0, %s200
      $region32: #{firstconv3x3_forward.1} parent=27 // pred_fallthru
        _
    $region28: #{firstconv3x3_forward.1} parent=5 // pred_fallthru
      _
    %p202 = scmp.le.s32.totalorder 1, %s10
    %p203 = scmp.lt.s32.totalorder %s10, 3
    %p204 = pnand %p202, %p203
    %p205 = pneg %p204
    // Predicated region
    $region33: #{firstconv3x3_forward.1} parent=5 // pred_check
      _
    $region34: #{firstconv3x3_forward.1} parent=5 // pred_check_branch
      %207 = sbr.rel (%p204) target = $region36
    $region35: #{firstconv3x3_forward.1} parent=5 // pred_region
      %s208 = ssub.s32 %s10, 1
      %p209 = scmp.lt.s32.totalorder %s19, 1
      %s210 = scalar_select %p209, %s19, 1
      %s211 = smul.addr %s210, 3
      %s212 = smul.addr %s211, 4
      %s213 = scalar_lea.vmem %s0, %s212
      %p214 = pneg %p48
      %p215 = pneg %p45
      %p216 = scmp.lt.s32.totalorder %s20, 0
      %s217 = scalar_select %p216, %s20, 0
      %s218 = smul.addr %s217, 4
      %s219 = scalar_lea.vmem %s1, %s218
      %p220 = pneg %p74
      %p221 = pneg %p71
      %p222 = scmp.lt.s32.totalorder %s20, 0
      %s223 = scalar_select %p222, %s20, 0
      %s224 = smul.addr %s223, 4
      %s225 = scalar_lea.vmem %s2, %s224
      %p226 = pneg %p100
      %p227 = pneg %p97
      %p228 = scmp.lt.s32.totalorder %s20, 0
      %s229 = scalar_select %p228, %s20, 0
      %s230 = smul.addr %s229, 8
      %s231 = scalar_lea.vmem %s3, %s230
      %p232 = pneg %p126
      %p233 = pneg %p123
      %p234 = pneg %p154
      %p235 = pneg %p151
      %p236 = scmp.lt.s32.totalorder %s19, 1
      %s237 = scalar_select %p236, %s19, 1
      %p238 = scmp.lt.s32.totalorder %s20, 0
      %s239 = scalar_select %p238, %s20, 0
      %s240 = sadd.s32 %s239, %s237
      %s241 = smul.addr %s240, 8
      %s242 = scalar_lea.vmem %s4, %s241
      %p243 = scmp.lt.s32.totalorder %s19, 1
      %s244 = scalar_select %p243, %s19, 1
      %s245 = smul.addr %s244, 3
      %s246 = smul.addr %s245, 4
      %s247 = scalar_lea.vmem %s0, %s246
      %p248 = scmp.lt.s32.totalorder %s20, 0
      %s249 = scalar_select %p248, %s20, 0
      %s250 = smul.addr %s249, 4
      %s251 = scalar_lea.vmem %s1, %s250
      %p252 = scmp.lt.s32.totalorder %s20, 0
      %s253 = scalar_select %p252, %s20, 0
      %s254 = smul.addr %s253, 4
      %s255 = scalar_lea.vmem %s2, %s254
      %p256 = scmp.lt.s32.totalorder %s20, 0
      %s257 = scalar_select %p256, %s20, 0
      %s258 = smul.addr %s257, 8
      %s259 = scalar_lea.vmem %s3, %s258
      %p260 = scmp.lt.s32.totalorder %s19, 1
      %s261 = scalar_select %p260, %s19, 1
      %p262 = scmp.lt.s32.totalorder %s20, 0
      %s263 = scalar_select %p262, %s20, 0
      %s264 = sadd.s32 %s263, %s261
      %s265 = smul.addr %s264, 8
      %s266 = scalar_lea.vmem %s4, %s265
      %v268 = vld [vmem:[%s251] sm:$0xf]
      %v269 = vld [vmem:[%s247] sm:$0xf]
      %v270 = vld [vmem:[%s247 + $0x4] sm:$0xf]
      %v271 = vld [vmem:[%s247 + $0x8] sm:$0xf]
      %v272 = vld [vmem:[%s255] sm:$0xf]
      %v273 = vld [vmem:[%s247 + $0x4] sm:$0x3]
      %v276 = vunpack.c.l.b16 %v269
      %v277 = vunpack.c.l.b16 %v273
      %v278 = vpack.c.b16 %v277, %v276
      %279 = vrot.lane.b32.xlu0 %v278, 120
      %v280 = vpop.permute.xlu0 %279
      %vm281 = vcmask 97280
      %v283 = vsel %vm281, %v272, 0
      %vm285 = vcmask 1045504
      %v287 = vsel %vm285, %v280, 0
      %289 = vmatpush.bf16.msra.mxu0 0
      %290 = vmatpush.bf16.msra.mxu0 0
      %291 = vmatpush.bf16.msra.mxu0 0
      %292 = vmatpush.bf16.msra.mxu0 0
      %293 = vmatpush.bf16.msra.mxu0 0
      %294 = vmatpush.bf16.msra.mxu0 0
      %295 = vmatpush.bf16.msra.mxu0 0
      %296 = vmatpush.bf16.msra.mxu0 %v287
      %297 = vmatmul.bf16.gmra.mxu0 %v283
      %v298 = vpop.f32.mrf.mxu0
      %v299 = vadd.f32 0.0, %v298
      %v300 = vpop.f32.mrf.mxu0
      %301 = vdwg.mxu0
      %v304 = vunpack.c.l.b16 %v270
      %v305 = vunpack.c.l.b16 %v271
      %v306 = vpack.c.b16 %v304, %v276
      %v307 = vpack.c.b16 %v305, %v305
      %vm309 = vcmask 195584
      %v311 = vsel %vm309, %v268, 0
      %vm313 = vcmask 1043456
      %v315 = vsel %vm313, %v307, 0
      %317 = vmatpush.bf16.msra.mxu0 0
      %318 = vmatpush.bf16.msra.mxu0 0
      %319 = vmatpush.bf16.msra.mxu0 0
      %320 = vmatpush.bf16.msra.mxu0 0
      %321 = vmatpush.bf16.msra.mxu0 0
      %322 = vmatpush.bf16.msra.mxu0 0
      %323 = vmatpush.bf16.msra.mxu0 %v315
      %324 = vmatpush.bf16.msra.mxu0 %v306
      %325 = vmatmul.bf16.gmra.mxu0 %v311
      %v326 = vpop.f32.mrf.mxu0
      %v327 = vadd.f32 %v299, %v326
      %v328 = vpop.f32.mrf.mxu0
      %329 = vdwg.mxu0
      %v330 = vld [vmem:[%s259] sm:$0xff]
      %332 = vset.pattern.permute.xlu0 0
      %333 = vperm.xlu0 %332, %v330
      %v334 = vpop.permute.xlu0 %333
      %v336 = vadd.f32 %v327, %v334
      %vm337 = vcmask 523264
      %338 = vst.msk [vmem:[%s266] sm:$0xff] %vm337, %v336
      %p339 = scmp.lt.s32.totalorder %s19, 1
      %s340 = scalar_select %p339, %s19, 1
      %p341 = scmp.lt.s32.totalorder %s20, 0
      %s342 = scalar_select %p341, %s20, 0
      %s343 = sadd.s32 %s342, %s340
      %s344 = smul.addr %s343, 8
      %s345 = scalar_lea.vmem %s4, %s344
      // Predicated region
      $region37: #{firstconv3x3_forward.1} parent=35 // pred_check
        %p346 = pneg %p151
      $region38: #{firstconv3x3_forward.1} parent=35 // pred_check_branch
        %348 = sbr.rel (%p346) target = $region40
      $region39: #{firstconv3x3_forward.1} parent=35 // pred_region
        _
      $region40: #{firstconv3x3_forward.1} parent=35 // pred_fallthru
        _
    $region36: #{firstconv3x3_forward.1} parent=5 // pred_fallthru
      _
    %p349 = scmp.le.s32.totalorder 2, %s10
    // Predicated region
    $region41: #{firstconv3x3_forward.1} parent=5 // pred_check
      %p350 = pneg %p349
    $region42: #{firstconv3x3_forward.1} parent=5 // pred_check_branch
      %352 = sbr.rel (%p350) target = $region44
    $region43: #{firstconv3x3_forward.1} parent=5 // pred_region
      %s353 = ssub.s32 %s10, 2
      // Predicated region
      $region45: #{firstconv3x3_forward.1} parent=43 // pred_check
        %p354 = pneg %p157
      $region46: #{firstconv3x3_forward.1} parent=43 // pred_check_branch
        %356 = sbr.rel (%p354) target = $region48
      $region47: #{firstconv3x3_forward.1} parent=43 // pred_region
        %p357 = scmp.lt.s32.totalorder %s21, 1
        %s358 = scalar_select %p357, %s21, 1
        %p359 = scmp.lt.s32.totalorder %s22, 0
        %s360 = scalar_select %p359, %s22, 0
        %s361 = sadd.s32 %s360, %s358
        %s362 = smul.addr %s361, 8
        %s363 = scalar_lea.vmem %s4, %s362
      $region48: #{firstconv3x3_forward.1} parent=43 // pred_fallthru
        _
    $region44: #{firstconv3x3_forward.1} parent=5 // pred_fallthru
      _
  $region6: #{firstconv3x3_forward.1} parent=0 // loop_footer
    %s14 = sadd.s32 1, %s10
  $region7: #{firstconv3x3_forward.1} parent=0 // loop_footer_branch
    %9 = sbr.rel target = $region3
  $region8: #{firstconv3x3_forward.1} parent=0 // loop_exit
    _

</llo_original>
